<compile_context>
chip_gen: v5e
topology: v5e:2x2
jax: 0.10.0
libtpu: 0.0.40
codegen_flags: <defaults>
</compile_context>

<pallas_src>
import math

import jax
import jax.numpy as jnp
from jax.experimental import pallas as pl
from jax.experimental.pallas import tpu as pltpu

LANE = 128
ACC_W = 2048                        # narrow-accumulator width (lanes)
MAX_BLOCK_BYTES = 8 * 1024 * 1024   # per-input per-step DMA cap


def _physical_vmem_bytes():
    try:
        cap = getattr(pltpu.get_tpu_info(), "vmem_capacity_bytes", None)
        if cap:
            return int(cap)
    except Exception:
        pass
    return 64 * 1024 * 1024         # conservative (v7x per-TC VMEM)


def _pick_fold(c, hw):
    """Smallest R with (C*R) % 8 == 0 and HW % R == 0 (else 1)."""
    if c % 8 == 0:
        return 1
    r = 8 // math.gcd(c, 8)
    return r if hw % r == 0 else 1


def _pick_blocks(c_fold, hw_f, x_bytes, t_bytes, block_lanes=None, acc_lanes=None):
    """Choose (hw_blk, n_chunks, acc_w, needs_mask, tail_len)."""
    if block_lanes is not None:                       # testing override
        hw_blk = min(int(block_lanes), hw_f)
        acc_w = int(acc_lanes) if acc_lanes is not None else min(hw_blk, ACC_W)
        if hw_blk % acc_w != 0:
            acc_w = hw_blk
    else:
        budget = int(_physical_vmem_bytes() * 0.7)
        # VMEM/lane if accumulators were as wide as the block:
        per_lane_wide = c_fold * (2 * (x_bytes + t_bytes) + 2 * 4)
        if hw_f * per_lane_wide <= budget:
            hw_blk = hw_f                             # whole folded row, one step
            acc_w = min(hw_blk, ACC_W)
            if hw_blk % acc_w != 0:
                acc_w = hw_blk
        else:
            budget -= 2 * c_fold * ACC_W * 4          # reserve narrow accumulators
            per_lane_in = 2 * c_fold * (x_bytes + t_bytes)
            cap = MAX_BLOCK_BYTES // (c_fold * max(x_bytes, t_bytes))
            max_blk = min(budget // per_lane_in, cap)
            hw_blk = max(ACC_W, (max_blk // ACC_W) * ACC_W)
            acc_w = ACC_W
    n_chunks = pl.cdiv(hw_f, hw_blk)
    needs_mask = (hw_f % hw_blk) != 0
    tail_len = hw_f - (n_chunks - 1) * hw_blk
    return hw_blk, n_chunks, acc_w, needs_mask, tail_len


def _make_kernel(acc_w, n_sub, needs_mask, tail_len, n_slabs, alpha, beta):
    """Build the per-(image, slab) reduction kernel with statics baked in."""

    def kernel(x_ref, t_ref, o_ref, acc_tp, acc_den):
        j = pl.program_id(1)
        nj = pl.num_programs(1)

        @pl.when(j == 0)
        def _init():
            acc_tp[...] = jnp.zeros_like(acc_tp)
            acc_den[...] = jnp.zeros_like(acc_den)

        def accum_slice(k, mask_tail):
            if isinstance(k, int):
                start = k * acc_w
            else:
                start = pl.multiple_of(k * acc_w, acc_w)
            x = x_ref[0, :, pl.ds(start, acc_w)].astype(jnp.float32)
            t = t_ref[0, :, pl.ds(start, acc_w)].astype(jnp.float32)
            # sigmoid with a single EUP transcendental (no abs/cmp/select/div).
            p = 0.5 * jnp.tanh(0.5 * x) + 0.5
            if mask_tail:
                # Mask BEFORE accumulation (stale-VMEM padding is NaN-safe).
                lane = jax.lax.broadcasted_iota(jnp.int32, x.shape, 1) + start
                valid = lane < tail_len
                p = jnp.where(valid, p, 0.0)
                t = jnp.where(valid, t, 0.0)
            acc_tp[...] += p * t
            acc_den[...] += alpha * p + beta * t

        def run_block(mask_tail):
            if n_sub == 1:
                accum_slice(0, mask_tail)
            else:
                def body(k, carry):
                    accum_slice(k, mask_tail)
                    return carry
                jax.lax.fori_loop(0, n_sub, body, 0, unroll=(n_sub <= 16))

        if needs_mask:
            is_tail = j == nj - 1
            if n_slabs > 1:
                is_tail = jnp.logical_and(
                    is_tail, pl.program_id(0) % n_slabs == n_slabs - 1)

            @pl.when(jnp.logical_not(is_tail))
            def _steady():
                run_block(False)

            @pl.when(is_tail)
            def _tail():
                run_block(True)
        else:
            run_block(False)

        @pl.when(j == nj - 1)
        def _finalize():
            o_ref[0, 0] = jnp.sum(acc_tp[...], axis=-1, keepdims=True)
            o_ref[0, 1] = jnp.sum(acc_den[...], axis=-1, keepdims=True)

    return kernel


def tversky_loss(inputs, targets, alpha=0.3, beta=0.7, smooth=1.0,
                 _block_lanes=None, _acc_lanes=None):
    """Pallas implementation of TverskyLoss.forward (classification=False).

    alpha/beta/smooth must be Python floats (baked into the kernel at trace
    time); if they ever become traced arrays, pass them as SMEM scalars.
    """
    assert inputs.shape == targets.shape and inputs.ndim == 4
    n, c, h, w = inputs.shape
    hw = h * w

    # Sublane fold (free contiguous reshape; no transpose / pad / cast in HBM).
    r = _pick_fold(c, hw)
    c_fold, hw_f = c * r, hw // r
    x = inputs.reshape(n, c_fold, hw_f)
    t = targets.reshape(n, c_fold, hw_f)
    x_bytes, t_bytes = x.dtype.itemsize, t.dtype.itemsize

    hw_blk, n_chunks, acc_w, needs_mask, tail_len = _pick_blocks(
        c_fold, hw_f, x_bytes, t_bytes, _block_lanes, _acc_lanes)
    n_sub = hw_blk // acc_w

    # Give v7x's second TensorCore work when there is only one image.
    n_slabs = 2 if (n == 1 and n_chunks >= 2 and n_chunks % 2 == 0) else 1
    cps = n_chunks // n_slabs
    n_out = n * n_slabs

    if n_slabs == 1:
        in_map = lambda s, j: (s, 0, j)
    else:
        in_map = lambda s, j: (s // n_slabs, 0, (s % n_slabs) * cps + j)

    in_spec = pl.BlockSpec((1, c_fold, hw_blk), in_map)
    out_spec = pl.BlockSpec((1, 2, c_fold, 1), lambda s, j: (s, 0, 0, 0))

    footprint = (2 * c_fold * hw_blk * (x_bytes + t_bytes)   # dbl-buffered inputs
                 + 2 * c_fold * acc_w * 4                    # accumulators
                 + 2 * 2 * 2 * c_fold * 4)                   # tiny outputs
    vmem_limit = int(min(_physical_vmem_bytes(),
                         max(32 * 1024 * 1024, footprint + (8 << 20))))

    partial = pl.pallas_call(
        _make_kernel(acc_w, n_sub, needs_mask, tail_len, n_slabs, alpha, beta),
        out_shape=jax.ShapeDtypeStruct((n_out, 2, c_fold, 1), jnp.float32),
        grid_spec=pltpu.PrefetchScalarGridSpec(
            num_scalar_prefetch=0,
            grid=(n_out, cps),
            in_specs=[in_spec, in_spec],
            out_specs=out_spec,
            scratch_shapes=[
                pltpu.VMEM((c_fold, acc_w), jnp.float32),
                pltpu.VMEM((c_fold, acc_w), jnp.float32),
            ],
        ),
        compiler_params=pltpu.CompilerParams(
            dimension_semantics=("parallel", "arbitrary"),
            vmem_limit_bytes=vmem_limit),
    )(x, t)

    # Per-class totals: sum over images/slabs and over the R folded rows.
    sums = partial.reshape(n_out, 2, c, r).sum(axis=(0, 3))  # (2, C)
    tp, den = sums[0], sums[1]
    # den = alpha*sum(p) + beta*sum(t);  (1-a-b)*tp + den = tp + a*FP + b*FN.
    tversky = (tp + smooth) / ((1.0 - alpha - beta) * tp + den + smooth)
    return 1.0 - jnp.mean(tversky)


def tversky_ref(inputs, targets, alpha=0.3, beta=0.7, smooth=1.0):
    """Pure-JAX mirror of the PyTorch forward (classification=False)."""
    c = inputs.shape[1]
    p = jax.nn.sigmoid(inputs.astype(jnp.float32))
    t = targets.astype(jnp.float32)
    p = jnp.transpose(p, (1, 0, 2, 3)).reshape(c, -1)
    t = jnp.transpose(t, (1, 0, 2, 3)).reshape(c, -1)
    tp = (p * t).sum(1)
    fp = ((1.0 - t) * p).sum(1)
    fn = (t * (1.0 - p)).sum(1)
    tv = (tp + smooth) / (tp + alpha * fp + beta * fn + smooth)
    return 1.0 - jnp.mean(tv)


if __name__ == "__main__":
    key = jax.random.PRNGKey(0)
    k1, k2 = jax.random.split(key)

    # NCHW, as in the PyTorch module (C=4 matches the reference reshape(4, -1)).
    inputs = jax.random.normal(k1, (2, 4, 16, 16), dtype=jnp.float32)           # logits
    targets = (jax.random.uniform(k2, (2, 4, 16, 16)) > 0.5).astype(jnp.float32)

    loss = jax.jit(tversky_loss)(inputs, targets)
    jax.block_until_ready(loss)
    ref = tversky_ref(inputs, targets)
    assert loss.shape == () and bool(jnp.isfinite(loss))
    assert bool(jnp.allclose(loss, ref, rtol=1e-5, atol=1e-6)), (loss, ref)

    # Extra coverage of the chunked / inner-accumulator-loop / ragged-tail /
    # 2-slab paths at tiny shapes (block sizes forced via testing overrides).
    extra = [((2, 4, 16, 64), 128, None),   # multi-chunk accumulation, no slabs
             ((1, 4, 16, 64), 256, 128),    # inner accumulator loop + 2 slabs
             ((1, 4, 16, 60), 256, 128)]    # ragged tail mask + 2 slabs
    for i, (shape, blk, accw) in enumerate(extra):
        ka, kb = jax.random.split(jax.random.PRNGKey(i + 1))
        xs = jax.random.normal(ka, shape, dtype=jnp.float32)
        ts = (jax.random.uniform(kb, shape) > 0.5).astype(jnp.float32)
        got = tversky_loss(xs, ts, _block_lanes=blk, _acc_lanes=accw)
        want = tversky_ref(xs, ts)
        assert bool(jnp.allclose(got, want, rtol=1e-5, atol=1e-6)), (shape, got, want)

    print("KERNEL_OK")
</pallas_src>

<mosaic_0001>
module attributes {stable_mosaic.version = 11 : i64} {
  func.func @kernel(%arg0: i32, %arg1: i32, %arg2: memref<1x8x128xf32, #tpu.memory_space<vmem>>, %arg3: memref<1x8x128xf32, #tpu.memory_space<vmem>>, %arg4: memref<1x2x8x1xf32, #tpu.memory_space<vmem>>, %arg5: memref<8x128xf32, #tpu.memory_space<vmem>>, %arg6: memref<8x128xf32, #tpu.memory_space<vmem>>) attributes {dimension_semantics = [#tpu.dimension_semantics<parallel>, #tpu.dimension_semantics<arbitrary>], iteration_bounds = array<i64: 2, 1>, scalar_prefetch = 0 : i64, scratch_operands = 2 : i64, tpu.core_type = #tpu.core_type<tc>, window_params = [{transform_indices = @transform_0, window_bounds = array<i64: 1, 8, 128>}, {transform_indices = @transform_1, window_bounds = array<i64: 1, 8, 128>}, {transform_indices = @transform_2, window_bounds = array<i64: 1, 2, 8, 1>}]} {
    %c0_i32 = arith.constant 0 : i32
    %0 = arith.cmpi eq, %arg1, %c0_i32 : i32
    %1 = arith.extui %0 : i1 to i32
    %c0_i32_0 = arith.constant 0 : i32
    %2 = arith.cmpi ne, %1, %c0_i32_0 : i32
    scf.if %2 {
      %cst_20 = arith.constant 0.000000e+00 : f32
      %29 = vector.broadcast %cst_20 : f32 to vector<8x128xf32>
      %c0_21 = arith.constant 0 : index
      %c0_22 = arith.constant 0 : index
      %30 = vector.load %arg5[%c0_21, %c0_22] : memref<8x128xf32, #tpu.memory_space<vmem>>, vector<8x128xf32>
      tpu.vector_store %arg5[%c0_21, %c0_22], %29 {strides = array<i32>} : memref<8x128xf32, #tpu.memory_space<vmem>>, vector<8x128xf32>,
      %cst_23 = arith.constant 0.000000e+00 : f32
      %31 = vector.broadcast %cst_23 : f32 to vector<8x128xf32>
      %c0_24 = arith.constant 0 : index
      %c0_25 = arith.constant 0 : index
      %32 = vector.load %arg6[%c0_24, %c0_25] : memref<8x128xf32, #tpu.memory_space<vmem>>, vector<8x128xf32>
      tpu.vector_store %arg6[%c0_24, %c0_25], %31 {strides = array<i32>} : memref<8x128xf32, #tpu.memory_space<vmem>>, vector<8x128xf32>,
    } else {
    }
    %c0 = arith.constant 0 : index
    %c0_1 = arith.constant 0 : index
    %c0_2 = arith.constant 0 : index
    %3 = vector.load %arg2[%c0, %c0_1, %c0_2] : memref<1x8x128xf32, #tpu.memory_space<vmem>>, vector<1x8x128xf32>
    %4 = vector.shape_cast %3 : vector<1x8x128xf32> to vector<8x128xf32>
    %c0_3 = arith.constant 0 : index
    %c0_4 = arith.constant 0 : index
    %c0_5 = arith.constant 0 : index
    %5 = vector.load %arg3[%c0_3, %c0_4, %c0_5] : memref<1x8x128xf32, #tpu.memory_space<vmem>>, vector<1x8x128xf32>
    %6 = vector.shape_cast %5 : vector<1x8x128xf32> to vector<8x128xf32>
    %cst = arith.constant 5.000000e-01 : f32
    %7 = vector.broadcast %cst : f32 to vector<8x128xf32>
    %8 = arith.mulf %7, %4 : vector<8x128xf32>
    %9 = math.tanh %8 : vector<8x128xf32>
    %cst_6 = arith.constant 5.000000e-01 : f32
    %10 = vector.broadcast %cst_6 : f32 to vector<8x128xf32>
    %11 = arith.mulf %10, %9 : vector<8x128xf32>
    %cst_7 = arith.constant 5.000000e-01 : f32
    %12 = vector.broadcast %cst_7 : f32 to vector<8x128xf32>
    %13 = arith.addf %11, %12 : vector<8x128xf32>
    %c0_8 = arith.constant 0 : index
    %c0_9 = arith.constant 0 : index
    %14 = vector.load %arg5[%c0_8, %c0_9] : memref<8x128xf32, #tpu.memory_space<vmem>>, vector<8x128xf32>
    %15 = arith.mulf %13, %6 : vector<8x128xf32>
    %16 = arith.addf %14, %15 : vector<8x128xf32>
    %c0_10 = arith.constant 0 : index
    %c0_11 = arith.constant 0 : index
    %17 = vector.load %arg5[%c0_10, %c0_11] : memref<8x128xf32, #tpu.memory_space<vmem>>, vector<8x128xf32>
    tpu.vector_store %arg5[%c0_10, %c0_11], %16 {strides = array<i32>} : memref<8x128xf32, #tpu.memory_space<vmem>>, vector<8x128xf32>,
    %c0_12 = arith.constant 0 : index
    %c0_13 = arith.constant 0 : index
    %18 = vector.load %arg6[%c0_12, %c0_13] : memref<8x128xf32, #tpu.memory_space<vmem>>, vector<8x128xf32>
    %cst_14 = arith.constant 3.000000e-01 : f32
    %19 = vector.broadcast %cst_14 : f32 to vector<8x128xf32>
    %20 = arith.mulf %19, %13 : vector<8x128xf32>
    %cst_15 = arith.constant 0.699999988 : f32
    %21 = vector.broadcast %cst_15 : f32 to vector<8x128xf32>
    %22 = arith.mulf %21, %6 : vector<8x128xf32>
    %23 = arith.addf %20, %22 : vector<8x128xf32>
    %24 = arith.addf %18, %23 : vector<8x128xf32>
    %c0_16 = arith.constant 0 : index
    %c0_17 = arith.constant 0 : index
    %25 = vector.load %arg6[%c0_16, %c0_17] : memref<8x128xf32, #tpu.memory_space<vmem>>, vector<8x128xf32>
    tpu.vector_store %arg6[%c0_16, %c0_17], %24 {strides = array<i32>} : memref<8x128xf32, #tpu.memory_space<vmem>>, vector<8x128xf32>,
    %c0_i32_18 = arith.constant 0 : i32
    %26 = arith.cmpi eq, %arg1, %c0_i32_18 : i32
    %27 = arith.extui %26 : i1 to i32
    %c0_i32_19 = arith.constant 0 : i32
    %28 = arith.cmpi ne, %27, %c0_i32_19 : i32
    scf.if %28 {
      %c0_20 = arith.constant 0 : index
      %c0_21 = arith.constant 0 : index
      %29 = vector.load %arg5[%c0_20, %c0_21] : memref<8x128xf32, #tpu.memory_space<vmem>>, vector<8x128xf32>
      %cst_22 = arith.constant dense<0.000000e+00> : vector<8xf32>
      %30 = vector.multi_reduction <add>, %29, %cst_22 [1] : vector<8x128xf32> to vector<8xf32>
      %31 = vector.shape_cast %30 : vector<8xf32> to vector<8x1xf32>
      %c0_23 = arith.constant 0 : index
      %c0_24 = arith.constant 0 : index
      %c0_25 = arith.constant 0 : index
      %c0_26 = arith.constant 0 : index
      %32 = vector.load %arg4[%c0_23, %c0_24, %c0_25, %c0_26] : memref<1x2x8x1xf32, #tpu.memory_space<vmem>>, vector<1x1x8x1xf32>
      %33 = vector.shape_cast %32 : vector<1x1x8x1xf32> to vector<8x1xf32>
      %34 = vector.shape_cast %31 : vector<8x1xf32> to vector<1x1x8x1xf32>
      tpu.vector_store %arg4[%c0_23, %c0_24, %c0_25, %c0_26], %34 {strides = array<i32>} : memref<1x2x8x1xf32, #tpu.memory_space<vmem>>, vector<1x1x8x1xf32>,
      %c0_27 = arith.constant 0 : index
      %c0_28 = arith.constant 0 : index
      %35 = vector.load %arg6[%c0_27, %c0_28] : memref<8x128xf32, #tpu.memory_space<vmem>>, vector<8x128xf32>
      %cst_29 = arith.constant dense<0.000000e+00> : vector<8xf32>
      %36 = vector.multi_reduction <add>, %35, %cst_29 [1] : vector<8x128xf32> to vector<8xf32>
      %37 = vector.shape_cast %36 : vector<8xf32> to vector<8x1xf32>
      %c0_30 = arith.constant 0 : index
      %c1 = arith.constant 1 : index
      %c0_31 = arith.constant 0 : index
      %c0_32 = arith.constant 0 : index
      %38 = vector.load %arg4[%c0_30, %c1, %c0_31, %c0_32] : memref<1x2x8x1xf32, #tpu.memory_space<vmem>>, vector<1x1x8x1xf32>
      %39 = vector.shape_cast %38 : vector<1x1x8x1xf32> to vector<8x1xf32>
      %40 = vector.shape_cast %37 : vector<8x1xf32> to vector<1x1x8x1xf32>
      tpu.vector_store %arg4[%c0_30, %c1, %c0_31, %c0_32], %40 {strides = array<i32>} : memref<1x2x8x1xf32, #tpu.memory_space<vmem>>, vector<1x1x8x1xf32>,
    } else {
    }
    return
  }
  func.func @transform_0(%arg0: i32, %arg1: i32) -> (i32, i32, i32) {
    %c0_i32 = arith.constant 0 : i32
    %c0_i32_0 = arith.constant 0 : i32
    return %arg0, %c0_i32, %arg1 : i32, i32, i32
  }
  func.func @transform_1(%arg0: i32, %arg1: i32) -> (i32, i32, i32) {
    %c0_i32 = arith.constant 0 : i32
    %c0_i32_0 = arith.constant 0 : i32
    return %arg0, %c0_i32, %arg1 : i32, i32, i32
  }
  func.func @transform_2(%arg0: i32, %arg1: i32) -> (i32, i32, i32, i32) {
    %c0_i32 = arith.constant 0 : i32
    %c0_i32_0 = arith.constant 0 : i32
    %c0_i32_1 = arith.constant 0 : i32
    %c0_i32_2 = arith.constant 0 : i32
    return %arg0, %c0_i32, %c0_i32_0, %c0_i32_1 : i32, i32, i32, i32
  }
}

</mosaic_0001>

<llo_original>
// kernel: tversky_loss.1
$region0: #{tversky_loss.1}
  #allocation0 [shape = 'u32[]', space=smem, size = 0x4, offset = 0x4, fixed_abs, tag = 'smem constant byte address 0x4 - core index']
  #allocation1 [shape = 'u32[72,128]{1,0:T(1,128)}', space=vmem, size = 0x9000, scoped, tag = 'internal scratch']
  #allocation2 [shape = 'f32[8,128]{1,0:T(8,128)}', space=vmem, size = 0x1000, scoped, tag = 'scratch operand']
  #allocation3 [shape = 'f32[8,128]{1,0:T(8,128)}', space=vmem, size = 0x1000, scoped, tag = 'scratch operand']
  %s0 = inlined_call_operand.vmem [shape: f32[2,8,128], index: 0, kind: input, shape index: {}]
  %s1 = inlined_call_operand.vmem [shape: f32[2,8,128], index: 1, kind: input, shape index: {}]
  %s2 = inlined_call_operand.vmem [shape: f32[2,2,8,1], index: 2, kind: output, shape index: {}]
  %s3 = sld [smem:[#allocation0]]
  $region49: #{tversky_loss.1} parent=0
    _
  %s5 = ssub.s32 1, %s3
  %s6 = scalar_select 0, %s5, %s3
  loop: start=0, step=1, limit=4
  $region2: #{tversky_loss.1} parent=0 // loop_pre_header
    _
  $region3: #{tversky_loss.1} parent=0 // loop_header
    %s8 = sphi 0, %s12
    %p9 = scmp.ge.s32.totalorder %s8, 4
    %s15 = sphi 0, %s27
    %s16 = sphi 0, %s23
    %s17 = sphi 0, %s15
    %s18 = sphi 0, %s16
    %s19 = sphi 0, %s17
    %s20 = sphi 0, %s18
    %s32 = sphi 0, %s34
    %s35 = sphi 0, %s32
    %s36 = sphi 0, %s35
    %s52 = sphi 0, %s36
    %s60 = sphi 0, %s62
    %s63 = sphi 0, %s60
    %s64 = sphi 0, %s63
    %s80 = sphi 0, %s64
    %s86 = sphi 0, %s88
    %s89 = sphi 0, %s86
    %s90 = sphi 0, %s89
    %s106 = sphi 0, %s90
  $region4: #{tversky_loss.1} parent=0 // loop_header_branch
    %11 = sbr.rel (%p9) target = $region8
  $region5: #{tversky_loss.1} parent=0 // loop_body
    %s13 = ssub.s32 %s8, 1
    %s14 = ssub.s32 %s8, 2
    %s21 = sadd.s32 1, %s16
    %p22 = scmp.ge.s32.totalorder %s21, 1
    %s23 = scalar_select %p22, 0, %s21
    %s24 = sadd.s32 1, %s15
    %s25 = scalar_select %p22, %s24, %s15
    %p26 = scmp.ge.s32.totalorder %s25, 2
    %s27 = scalar_select %p26, 0, %s25
    %s28 = ssub.s32 %s15, %s27
    %s29 = ssub.s32 %s16, %s23
    %s30 = sor.u32 %s28, %s29
    %p31 = scmp.eq.s32.totalorder %s30, 0
    %s33 = sadd.s32 %s32, 1
    %s34 = scalar_select %p31, %s32, %s33
    %p37 = pneg %p31
    %p38 = scmp.eq.s32.totalorder %s8, 1
    %p39 = por %p37, %p38
    %p40 = scmp.ne.s32.totalorder %s32, %s35
    %p41 = scmp.eq.s32.totalorder %s8, 0
    %p42 = por %p40, %p41
    %p43 = scmp.ne.s32.totalorder %s32, %s35
    %p44 = scmp.eq.s32.totalorder %s13, 1
    %p45 = por %p43, %p44
    %p46 = scmp.ne.s32.totalorder %s35, %s36
    %p47 = scmp.eq.s32.totalorder %s13, 0
    %p48 = por %p46, %p47
    %p49 = scmp.ne.s32.totalorder %s35, %s36
    %p50 = scmp.eq.s32.totalorder %s14, 1
    %p51 = por %p49, %p50
    %p53 = scmp.ne.s32.totalorder %s36, %s52
    %p54 = scmp.eq.s32.totalorder %s14, 0
    %p55 = por %p53, %p54
    %s56 = ssub.s32 %s15, %s27
    %s57 = ssub.s32 %s16, %s23
    %s58 = sor.u32 %s56, %s57
    %p59 = scmp.eq.s32.totalorder %s58, 0
    %s61 = sadd.s32 %s60, 1
    %s62 = scalar_select %p59, %s60, %s61
    %p65 = pneg %p59
    %p66 = scmp.eq.s32.totalorder %s8, 1
    %p67 = por %p65, %p66
    %p68 = scmp.ne.s32.totalorder %s60, %s63
    %p69 = scmp.eq.s32.totalorder %s8, 0
    %p70 = por %p68, %p69
    %p71 = scmp.ne.s32.totalorder %s60, %s63
    %p72 = scmp.eq.s32.totalorder %s13, 1
    %p73 = por %p71, %p72
    %p74 = scmp.ne.s32.totalorder %s63, %s64
    %p75 = scmp.eq.s32.totalorder %s13, 0
    %p76 = por %p74, %p75
    %p77 = scmp.ne.s32.totalorder %s63, %s64
    %p78 = scmp.eq.s32.totalorder %s14, 1
    %p79 = por %p77, %p78
    %p81 = scmp.ne.s32.totalorder %s64, %s80
    %p82 = scmp.eq.s32.totalorder %s14, 0
    %p83 = por %p81, %p82
    %s84 = ssub.s32 %s15, %s27
    %p85 = scmp.eq.s32.totalorder %s84, 0
    %s87 = sadd.s32 %s86, 1
    %s88 = scalar_select %p85, %s86, %s87
    %p91 = pneg %p85
    %p92 = scmp.eq.s32.totalorder %s8, 1
    %p93 = por %p91, %p92
    %p94 = scmp.ne.s32.totalorder %s86, %s89
    %p95 = scmp.eq.s32.totalorder %s8, 0
    %p96 = por %p94, %p95
    %p97 = scmp.ne.s32.totalorder %s86, %s89
    %p98 = scmp.eq.s32.totalorder %s13, 1
    %p99 = por %p97, %p98
    %p100 = scmp.ne.s32.totalorder %s89, %s90
    %p101 = scmp.eq.s32.totalorder %s13, 0
    %p102 = por %p100, %p101
    %p103 = scmp.ne.s32.totalorder %s89, %s90
    %p104 = scmp.eq.s32.totalorder %s14, 1
    %p105 = por %p103, %p104
    %p107 = scmp.ne.s32.totalorder %s90, %s106
    %p108 = scmp.eq.s32.totalorder %s14, 0
    %p109 = por %p107, %p108
    %p110 = scmp.le.s32.totalorder 1, %s8
    %p111 = scmp.lt.s32.totalorder %s8, 3
    %p112 = pnand %p110, %p111
    %p113 = pneg %p112
    // Predicated region
    $region9: #{tversky_loss.1} parent=5 // pred_check
      _
    $region10: #{tversky_loss.1} parent=5 // pred_check_branch
      %115 = sbr.rel (%p112) target = $region12
    $region11: #{tversky_loss.1} parent=5 // pred_region
      %s116 = ssub.s32 %s8, 1
    $region12: #{tversky_loss.1} parent=5 // pred_fallthru
      _
    %p117 = scmp.lt.s32.totalorder %s8, 2
    // Predicated region
    $region13: #{tversky_loss.1} parent=5 // pred_check
      %p118 = pneg %p117
    $region14: #{tversky_loss.1} parent=5 // pred_check_branch
      %120 = sbr.rel (%p118) target = $region16
    $region15: #{tversky_loss.1} parent=5 // pred_region
      // Predicated region
      $region17: #{tversky_loss.1} parent=15 // pred_check
        %p121 = pneg %p42
      $region18: #{tversky_loss.1} parent=15 // pred_check_branch
        %123 = sbr.rel (%p121) target = $region20
      $region19: #{tversky_loss.1} parent=15 // pred_region
        %p124 = scmp.lt.s32.totalorder %s15, 1
        %s125 = scalar_select %p124, %s15, 1
        %p126 = scmp.lt.s32.totalorder %s16, 0
        %s127 = scalar_select %p126, %s16, 0
        %s128 = sadd.s32 %s127, %s125
        %s129 = smul.addr %s128, 8
        %s130 = scalar_lea.vmem %s0, %s129
      $region20: #{tversky_loss.1} parent=15 // pred_fallthru
        _
      // Predicated region
      $region21: #{tversky_loss.1} parent=15 // pred_check
        %p131 = pneg %p70
      $region22: #{tversky_loss.1} parent=15 // pred_check_branch
        %133 = sbr.rel (%p131) target = $region24
      $region23: #{tversky_loss.1} parent=15 // pred_region
        %p134 = scmp.lt.s32.totalorder %s15, 1
        %s135 = scalar_select %p134, %s15, 1
        %p136 = scmp.lt.s32.totalorder %s16, 0
        %s137 = scalar_select %p136, %s16, 0
        %s138 = sadd.s32 %s137, %s135
        %s139 = smul.addr %s138, 8
        %s140 = scalar_lea.vmem %s1, %s139
      $region24: #{tversky_loss.1} parent=15 // pred_fallthru
        _
    $region16: #{tversky_loss.1} parent=5 // pred_fallthru
      _
    %p141 = scmp.le.s32.totalorder 1, %s8
    %p142 = scmp.lt.s32.totalorder %s8, 3
    %p143 = pnand %p141, %p142
    %p144 = pneg %p143
    // Predicated region
    $region25: #{tversky_loss.1} parent=5 // pred_check
      _
    $region26: #{tversky_loss.1} parent=5 // pred_check_branch
      %146 = sbr.rel (%p143) target = $region28
    $region27: #{tversky_loss.1} parent=5 // pred_region
      %s147 = ssub.s32 %s8, 1
      %p148 = scmp.lt.s32.totalorder %s17, 1
      %s149 = scalar_select %p148, %s17, 1
      %p150 = scmp.lt.s32.totalorder %s18, 0
      %s151 = scalar_select %p150, %s18, 0
      %s152 = sadd.s32 %s151, %s149
      %s153 = smul.addr %s152, 8
      %s154 = scalar_lea.vmem %s0, %s153
      %p155 = pneg %p48
      %p156 = pneg %p45
      %p157 = scmp.lt.s32.totalorder %s17, 1
      %s158 = scalar_select %p157, %s17, 1
      %p159 = scmp.lt.s32.totalorder %s18, 0
      %s160 = scalar_select %p159, %s18, 0
      %s161 = sadd.s32 %s160, %s158
      %s162 = smul.addr %s161, 8
      %s163 = scalar_lea.vmem %s1, %s162
      %p164 = pneg %p76
      %p165 = pneg %p73
      %p166 = pneg %p102
      %p167 = pneg %p99
      %p168 = scmp.lt.s32.totalorder %s17, 1
      %s169 = scalar_select %p168, %s17, 1
      %s170 = smul.addr %s169, 2
      %s171 = smul.addr %s170, 8
      %s172 = scalar_lea.vmem %s2, %s171
      %p173 = scmp.lt.s32.totalorder %s17, 1
      %s174 = scalar_select %p173, %s17, 1
      %p175 = scmp.lt.s32.totalorder %s18, 0
      %s176 = scalar_select %p175, %s18, 0
      %s177 = sadd.s32 %s176, %s174
      %s178 = smul.addr %s177, 8
      %s179 = scalar_lea.vmem %s0, %s178
      %p180 = scmp.lt.s32.totalorder %s17, 1
      %s181 = scalar_select %p180, %s17, 1
      %p182 = scmp.lt.s32.totalorder %s18, 0
      %s183 = scalar_select %p182, %s18, 0
      %s184 = sadd.s32 %s183, %s181
      %s185 = smul.addr %s184, 8
      %s186 = scalar_lea.vmem %s1, %s185
      %p187 = scmp.lt.s32.totalorder %s17, 1
      %s188 = scalar_select %p187, %s17, 1
      %s189 = smul.addr %s188, 2
      %s190 = smul.addr %s189, 8
      %s191 = scalar_lea.vmem %s2, %s190
      %p192 = scmp.eq.s32.totalorder %s18, 0
      // Predicated region
      $region29: #{tversky_loss.1} parent=27 // pred_check
        %p193 = pneg %p192
      $region30: #{tversky_loss.1} parent=27 // pred_check_branch
        %195 = sbr.rel (%p193) target = $region32
      $region31: #{tversky_loss.1} parent=27 // pred_region
        %196 = vst [vmem:[#allocation2] sm:$0xff] 0.0
        %197 = vst [vmem:[#allocation3] sm:$0xff] 0.0
      $region32: #{tversky_loss.1} parent=27 // pred_fallthru
        _
      %v198 = vld [vmem:[%s179] sm:$0xff]
      %v199 = vld [vmem:[%s186] sm:$0xff]
      %v200 = vmul.f32 %v198, 0.5
      %v201 = vtanh.pop %v200
      %v202 = vmul.f32 %v201, 0.5
      %v203 = vadd.f32 %v202, 0.5
      %v204 = vld [vmem:[#allocation2] sm:$0xff]
      %v205 = vmul.f32 %v203, %v199
      %v206 = vadd.f32 %v204, %v205
      %207 = vst [vmem:[#allocation2] sm:$0xff] %v206
      %v208 = vld [vmem:[#allocation3] sm:$0xff]
      %v209 = vmul.f32 %v203, 0.3
      %v210 = vmul.f32 %v199, 0.7
      %v211 = vadd.f32 %v209, %v210
      %v212 = vadd.f32 %v208, %v211
      %213 = vst [vmem:[#allocation3] sm:$0xff] %v212
      // Predicated region
      $region33: #{tversky_loss.1} parent=27 // pred_check
        %p214 = pneg %p192
      $region34: #{tversky_loss.1} parent=27 // pred_check_branch
        %216 = sbr.rel (%p214) target = $region36
      $region35: #{tversky_loss.1} parent=27 // pred_region
        %v217 = vld [vmem:[#allocation2] sm:$0xff]
        %218 = vadd.xlane.f32.xlu0 %v217
        %v219 = vpop.xlane.xlu0 %218
        %vm220 = vcmask 7168
        %221 = vst.msk [vmem:[%s191] sm:$0xff] %vm220, %v219
        %v222 = vld [vmem:[#allocation3] sm:$0xff]
        %223 = vadd.xlane.f32.xlu0 %v222
        %v224 = vpop.xlane.xlu0 %223
        %s225 = scalar_lea.vmem %s191, 8
        %226 = vst.msk [vmem:[%s225] sm:$0xff] %vm220, %v224
      $region36: #{tversky_loss.1} parent=27 // pred_fallthru
        _
      %p227 = scmp.lt.s32.totalorder %s17, 1
      %s228 = scalar_select %p227, %s17, 1
      %s229 = smul.addr %s228, 2
      %s230 = smul.addr %s229, 8
      %s231 = scalar_lea.vmem %s2, %s230
      // Predicated region
      $region37: #{tversky_loss.1} parent=27 // pred_check
        %p232 = pneg %p99
      $region38: #{tversky_loss.1} parent=27 // pred_check_branch
        %234 = sbr.rel (%p232) target = $region40
      $region39: #{tversky_loss.1} parent=27 // pred_region
        _
      $region40: #{tversky_loss.1} parent=27 // pred_fallthru
        _
    $region28: #{tversky_loss.1} parent=5 // pred_fallthru
      _
    %p235 = scmp.le.s32.totalorder 2, %s8
    // Predicated region
    $region41: #{tversky_loss.1} parent=5 // pred_check
      %p236 = pneg %p235
    $region42: #{tversky_loss.1} parent=5 // pred_check_branch
      %238 = sbr.rel (%p236) target = $region44
    $region43: #{tversky_loss.1} parent=5 // pred_region
      %s239 = ssub.s32 %s8, 2
      // Predicated region
      $region45: #{tversky_loss.1} parent=43 // pred_check
        %p240 = pneg %p105
      $region46: #{tversky_loss.1} parent=43 // pred_check_branch
        %242 = sbr.rel (%p240) target = $region48
      $region47: #{tversky_loss.1} parent=43 // pred_region
        %p243 = scmp.lt.s32.totalorder %s19, 1
        %s244 = scalar_select %p243, %s19, 1
        %s245 = smul.addr %s244, 2
        %s246 = smul.addr %s245, 8
        %s247 = scalar_lea.vmem %s2, %s246
      $region48: #{tversky_loss.1} parent=43 // pred_fallthru
        _
    $region44: #{tversky_loss.1} parent=5 // pred_fallthru
      _
  $region6: #{tversky_loss.1} parent=0 // loop_footer
    %s12 = sadd.s32 1, %s8
  $region7: #{tversky_loss.1} parent=0 // loop_footer_branch
    %7 = sbr.rel target = $region3
  $region8: #{tversky_loss.1} parent=0 // loop_exit
    _

</llo_original>
